<compile_context>
chip_gen: v5e
topology: v5e:2x2
jax: 0.10.0
libtpu: 0.0.40
codegen_flags: <defaults>
</compile_context>

<pallas_src>
import functools

import jax
import jax.numpy as jnp
from jax.experimental import pallas as pl
from jax.experimental.pallas import tpu as pltpu


def _round_up(x, m):
    return (x + m - 1) // m * m


def mlp_kernel(x_ref, w1_ref, b1_ref, w2_ref, b2_ref, o_ref):
    # Layer 1: bf16 MXU matmul, f32 accumulate; bias + ReLU in f32 (VPU).
    h = jnp.dot(x_ref[...], w1_ref[...], preferred_element_type=jnp.float32)
    h = jnp.maximum(h + b1_ref[...], 0.0)
    # Layer 2: cast activations back to bf16 for the MXU, accumulate in f32.
    y = jnp.dot(h.astype(jnp.bfloat16), w2_ref[...],
                preferred_element_type=jnp.float32)
    # bf16 output slab: halves the dominant HBM write stream; accuracy is
    # already bounded by the bf16 MXU operands.
    o_ref[...] = (y + b2_ref[...]).astype(o_ref.dtype)


def prepare_params(w1, b1, w2, b2):
    """One-time param prep (hoisted out of the forward path).

    Pads every feature dim to a multiple of 128 (lane-dense, MXU-friendly)
    and casts matmul operands to bf16; biases stay f32. Padded rows/cols are
    zero, so they never contaminate real outputs through matmul/ReLU/bias.
    """
    in_f, hid = w1.shape
    out_f = w2.shape[1]
    in_p = _round_up(in_f, 128)
    hid_p = _round_up(hid, 128)
    out_p = _round_up(out_f, 128)

    w1p = jnp.pad(w1, ((0, in_p - in_f), (0, hid_p - hid))).astype(jnp.bfloat16)
    w2p = jnp.pad(w2, ((0, hid_p - hid), (0, out_p - out_f))).astype(jnp.bfloat16)
    b1p = jnp.pad(b1.reshape(1, -1).astype(jnp.float32),
                  ((0, 0), (0, hid_p - hid)))
    b2p = jnp.pad(b2.reshape(1, -1).astype(jnp.float32),
                  ((0, 0), (0, out_p - out_f)))
    return w1p, b1p, w2p, b2p


@functools.partial(jax.jit, static_argnames=("out_features", "tile_b"))
def simple_nn_forward(x, w1p, b1p, w2p, b2p, *, out_features, tile_b=1024):
    """Fused MLP forward: (B, in) -> (B, out_features), f32 output.

    Expects params already prepared by `prepare_params` (padded, bf16 weights,
    f32 biases).  Only the per-call input x is padded/cast here.
    """
    B, in_f = x.shape
    in_p, hid_p = w1p.shape
    out_p = w2p.shape[1]

    # Batch tiling:
    #  * multiples of 16 so bf16 x tiles fill (16,128) vregs,
    #  * >=2 grid steps when B allows it (v7x megacore sharding of the
    #    "parallel" axis; harmless on single-TC v5e/v6e),
    #  * pad batch only to a tile multiple derived from round_up(B,16) so a
    #    near-multiple batch never adds a whole dead tile,
    #  * cap at 4096 rows (with an explicit VMEM limit) to stay inside v5e's
    #    smaller scoped-VMEM budget even for user-supplied large tiles.
    b16 = _round_up(B, 16)
    tile_b = max(16, min(tile_b, _round_up(pl.cdiv(b16, 2), 16)))
    tile_b = min(tile_b, 4096)
    b_p = _round_up(b16, tile_b)

    xp = jnp.pad(x, ((0, b_p - B), (0, in_p - in_f))).astype(jnp.bfloat16)

    grid = (b_p // tile_b,)
    out_padded = pl.pallas_call(
        mlp_kernel,
        out_shape=jax.ShapeDtypeStruct((b_p, out_p), jnp.bfloat16),
        grid=grid,
        in_specs=[
            pl.BlockSpec((tile_b, in_p), lambda i: (i, 0)),   # x: tiled over batch
            pl.BlockSpec((in_p, hid_p), lambda i: (0, 0)),    # W1: resident
            pl.BlockSpec((1, hid_p), lambda i: (0, 0)),       # b1: resident
            pl.BlockSpec((hid_p, out_p), lambda i: (0, 0)),   # W2: resident
            pl.BlockSpec((1, out_p), lambda i: (0, 0)),       # b2: resident
        ],
        out_specs=pl.BlockSpec((tile_b, out_p), lambda i: (i, 0)),
        compiler_params=pltpu.CompilerParams(
            dimension_semantics=("parallel",),
            vmem_limit_bytes=64 * 1024 * 1024),
    )(xp, w1p, b1p, w2p, b2p)

    # Strip batch/class padding and upcast only the real slice (layout
    # plumbing in the wrapper, fused by XLA).
    return out_padded[:B, :out_features].astype(jnp.float32)


def init_params(key, input_size, hidden_size, output_size):
    """Deterministic init mimicking nn.Linear's U(-1/sqrt(fan_in), 1/sqrt(fan_in))."""
    k1, k2, k3, k4 = jax.random.split(key, 4)
    bound1 = 1.0 / jnp.sqrt(jnp.float32(input_size))
    bound2 = 1.0 / jnp.sqrt(jnp.float32(hidden_size))
    w1 = jax.random.uniform(k1, (input_size, hidden_size), jnp.float32,
                            minval=-bound1, maxval=bound1)
    b1 = jax.random.uniform(k2, (hidden_size,), jnp.float32,
                            minval=-bound1, maxval=bound1)
    w2 = jax.random.uniform(k3, (hidden_size, output_size), jnp.float32,
                            minval=-bound2, maxval=bound2)
    b2 = jax.random.uniform(k4, (output_size,), jnp.float32,
                            minval=-bound2, maxval=bound2)
    return w1, b1, w2, b2


if __name__ == "__main__":
    # IRIS-like problem: 4 features -> 32 hidden -> 3 classes, batch of 8.
    batch, input_size, hidden_size, output_size = 8, 4, 32, 3

    key = jax.random.PRNGKey(0)
    kx, kp = jax.random.split(key)
    x = jax.random.normal(kx, (batch, input_size), jnp.float32)
    w1, b1, w2, b2 = init_params(kp, input_size, hidden_size, output_size)

    # One-time param prep; the per-call forward never re-pads/re-casts weights.
    w1p, b1p, w2p, b2p = prepare_params(w1, b1, w2, b2)
    w1p, b1p, w2p, b2p = jax.block_until_ready((w1p, b1p, w2p, b2p))

    out = simple_nn_forward(x, w1p, b1p, w2p, b2p, out_features=output_size)
    out = jax.block_until_ready(out)

    # Plain-JAX f32 reference of the same forward pass.  Tolerance reflects
    # bf16 MXU operands (f32 accumulation) and the bf16 output slab.
    ref = jnp.maximum(x @ w1 + b1[None, :], 0.0) @ w2 + b2[None, :]
    assert out.shape == (batch, output_size)
    assert jnp.allclose(out, ref, atol=5e-2, rtol=5e-2), (
        f"max abs err {jnp.max(jnp.abs(out - ref))}")

    print("KERNEL_OK")
</pallas_src>

<mosaic_0001>
module attributes {stable_mosaic.version = 11 : i64} {
  func.func @mlp_kernel(%arg0: i32, %arg1: memref<16x128xbf16, #tpu.memory_space<vmem>>, %arg2: memref<128x128xbf16, #tpu.memory_space<vmem>>, %arg3: memref<1x128xf32, #tpu.memory_space<vmem>>, %arg4: memref<128x128xbf16, #tpu.memory_space<vmem>>, %arg5: memref<1x128xf32, #tpu.memory_space<vmem>>, %arg6: memref<16x128xbf16, #tpu.memory_space<vmem>>) attributes {dimension_semantics = [#tpu.dimension_semantics<parallel>], iteration_bounds = array<i64: 1>, scalar_prefetch = 0 : i64, scratch_operands = 0 : i64, tpu.core_type = #tpu.core_type<tc>, window_params = [{transform_indices = @transform_0, window_bounds = array<i64: 16, 128>}, {pipeline_mode = #tpu.pipeline_mode<synchronous>, transform_indices = @transform_1, window_bounds = array<i64: 128, 128>}, {pipeline_mode = #tpu.pipeline_mode<synchronous>, transform_indices = @transform_2, window_bounds = array<i64: 1, 128>}, {pipeline_mode = #tpu.pipeline_mode<synchronous>, transform_indices = @transform_3, window_bounds = array<i64: 128, 128>}, {pipeline_mode = #tpu.pipeline_mode<synchronous>, transform_indices = @transform_4, window_bounds = array<i64: 1, 128>}, {transform_indices = @transform_5, window_bounds = array<i64: 16, 128>}]} {
    %c0 = arith.constant 0 : index
    %c0_0 = arith.constant 0 : index
    %0 = vector.load %arg1[%c0, %c0_0] : memref<16x128xbf16, #tpu.memory_space<vmem>>, vector<16x128xbf16>
    %c0_1 = arith.constant 0 : index
    %c0_2 = arith.constant 0 : index
    %1 = vector.load %arg2[%c0_1, %c0_2] : memref<128x128xbf16, #tpu.memory_space<vmem>>, vector<128x128xbf16>
    %cst = arith.constant dense<0.000000e+00> : vector<16x128xf32>
    %2 = tpu.matmul %0, %1, %cst {dimension_numbers = #tpu.dot_dimension_numbers<[1], [0], [0], [1], [0, 0, 1, 1], [], []>} : vector<16x128xbf16>, vector<128x128xbf16>, vector<16x128xf32> -> vector<16x128xf32>
    %c0_3 = arith.constant 0 : index
    %c0_4 = arith.constant 0 : index
    %3 = vector.load %arg3[%c0_3, %c0_4] : memref<1x128xf32, #tpu.memory_space<vmem>>, vector<1x128xf32>
    %4 = vector.broadcast %3 : vector<1x128xf32> to vector<16x128xf32>
    %5 = arith.addf %2, %4 : vector<16x128xf32>
    %cst_5 = arith.constant 0.000000e+00 : f32
    %6 = vector.broadcast %cst_5 : f32 to vector<16x128xf32>
    %7 = arith.maximumf %5, %6 : vector<16x128xf32>
    %8 = arith.truncf %7 : vector<16x128xf32> to vector<16x128xbf16>
    %c0_6 = arith.constant 0 : index
    %c0_7 = arith.constant 0 : index
    %9 = vector.load %arg4[%c0_6, %c0_7] : memref<128x128xbf16, #tpu.memory_space<vmem>>, vector<128x128xbf16>
    %cst_8 = arith.constant dense<0.000000e+00> : vector<16x128xf32>
    %10 = tpu.matmul %8, %9, %cst_8 {dimension_numbers = #tpu.dot_dimension_numbers<[1], [0], [0], [1], [0, 0, 1, 1], [], []>} : vector<16x128xbf16>, vector<128x128xbf16>, vector<16x128xf32> -> vector<16x128xf32>
    %c0_9 = arith.constant 0 : index
    %c0_10 = arith.constant 0 : index
    %11 = vector.load %arg5[%c0_9, %c0_10] : memref<1x128xf32, #tpu.memory_space<vmem>>, vector<1x128xf32>
    %12 = vector.broadcast %11 : vector<1x128xf32> to vector<16x128xf32>
    %13 = arith.addf %10, %12 : vector<16x128xf32>
    %14 = arith.truncf %13 : vector<16x128xf32> to vector<16x128xbf16>
    %c0_11 = arith.constant 0 : index
    %c0_12 = arith.constant 0 : index
    %15 = vector.load %arg6[%c0_11, %c0_12] : memref<16x128xbf16, #tpu.memory_space<vmem>>, vector<16x128xbf16>
    tpu.vector_store %arg6[%c0_11, %c0_12], %14 {strides = array<i32>} : memref<16x128xbf16, #tpu.memory_space<vmem>>, vector<16x128xbf16>,
    return
  }
  func.func @transform_0(%arg0: i32) -> (i32, i32) {
    %c0_i32 = arith.constant 0 : i32
    %c0_i32_0 = arith.constant 0 : i32
    return %arg0, %c0_i32 : i32, i32
  }
  func.func @transform_1(%arg0: i32) -> (i32, i32) {
    %c0_i32 = arith.constant 0 : i32
    %c0_i32_0 = arith.constant 0 : i32
    %c0_i32_1 = arith.constant 0 : i32
    return %c0_i32, %c0_i32_0 : i32, i32
  }
  func.func @transform_2(%arg0: i32) -> (i32, i32) {
    %c0_i32 = arith.constant 0 : i32
    %c0_i32_0 = arith.constant 0 : i32
    %c0_i32_1 = arith.constant 0 : i32
    return %c0_i32, %c0_i32_0 : i32, i32
  }
  func.func @transform_3(%arg0: i32) -> (i32, i32) {
    %c0_i32 = arith.constant 0 : i32
    %c0_i32_0 = arith.constant 0 : i32
    %c0_i32_1 = arith.constant 0 : i32
    return %c0_i32, %c0_i32_0 : i32, i32
  }
  func.func @transform_4(%arg0: i32) -> (i32, i32) {
    %c0_i32 = arith.constant 0 : i32
    %c0_i32_0 = arith.constant 0 : i32
    %c0_i32_1 = arith.constant 0 : i32
    return %c0_i32, %c0_i32_0 : i32, i32
  }
  func.func @transform_5(%arg0: i32) -> (i32, i32) {
    %c0_i32 = arith.constant 0 : i32
    %c0_i32_0 = arith.constant 0 : i32
    return %arg0, %c0_i32 : i32, i32
  }
}

</mosaic_0001>

<llo_original>
// kernel: simple_nn_forward.1
$region0: #{simple_nn_forward.1}
  #allocation0 [shape = 'u32[]', space=smem, size = 0x4, offset = 0x4, fixed_abs, tag = 'smem constant byte address 0x4 - core index']
  #allocation1 [shape = 'u32[72,128]{1,0:T(1,128)}', space=vmem, size = 0x9000, scoped, tag = 'internal scratch']
  %s0 = inlined_call_operand.vmem [shape: bf16[16,128], index: 0, kind: input, shape index: {}]
  %s1 = inlined_call_operand.hbm [shape: bf16[128,128], index: 1, kind: input, shape index: {}]
  %s2 = inlined_call_operand.vmem [shape: f32[1,128], index: 2, kind: input, shape index: {}]
  %s3 = inlined_call_operand.hbm [shape: bf16[128,128], index: 3, kind: input, shape index: {}]
  %s4 = inlined_call_operand.vmem [shape: f32[1,128], index: 4, kind: input, shape index: {}]
  %s5 = inlined_call_operand.vmem [shape: bf16[16,128], index: 5, kind: output, shape index: {}]
  %s6 = sld [smem:[#allocation0]]
  $region38: #{simple_nn_forward.1} parent=0
    _
  %s8 = ssub.s32 1, %s6
  %s9 = scalar_select 0, %s8, %s6
  $region1: #{simple_nn_forward.1} parent=0
    #allocation2 [shape = 'u8[32768]{0}', space=vmem, size = 0x8000, scoped, tag = 'input window, operand 1, single buffered']
    #allocation3 [shape = 's32[1]{0}', space=sflag, size = 0x4, scoped, tag = 'scoped memory for simple_nn_forward.1']
    #allocation4 [shape = 'u8[32768]{0}', space=vmem, size = 0x8000, scoped, tag = 'input window, operand 3, single buffered']
    #allocation5 [shape = 's32[1]{0}', space=sflag, size = 0x4, scoped, tag = 'scoped memory for simple_nn_forward.1']
    %10 = vsyncpa [#allocation3], 0
    %11 = vsyncpa [#allocation5], 0
    // Predicated region
    $region2: #{simple_nn_forward.1} parent=1 // pred_check
      _
    $region3: #{simple_nn_forward.1} parent=1 // pred_check_branch
      %13 = sbr.rel (0) target = $region5
    $region4: #{simple_nn_forward.1} parent=1 // pred_region
      _
    $region5: #{simple_nn_forward.1} parent=1 // pred_fallthru
      _
    // Predicated region
    $region6: #{simple_nn_forward.1} parent=1 // pred_check
      _
    $region7: #{simple_nn_forward.1} parent=1 // pred_check_branch
      %15 = sbr.rel (0) target = $region9
    $region8: #{simple_nn_forward.1} parent=1 // pred_region
      %17 = vsyncadd [#allocation3], 0
      %s18 = sshll.u32 %s1, 4
      %s19 = int_to_ptr.hbm [resolvable:$true] %s18
      %s20 = sshll.u32 [#allocation2], 4
      %s21 = int_to_ptr.vmem [resolvable:$true] %s20
      %26 = dma.hbm_to_vmem [thread:$0]  %s19, 1024, %s21, [#allocation3], 64, 64, 4
    $region9: #{simple_nn_forward.1} parent=1 // pred_fallthru
      _
    // Predicated region
    $region10: #{simple_nn_forward.1} parent=1 // pred_check
      _
    $region11: #{simple_nn_forward.1} parent=1 // pred_check_branch
      %28 = sbr.rel (0) target = $region13
    $region12: #{simple_nn_forward.1} parent=1 // pred_region
      _
    $region13: #{simple_nn_forward.1} parent=1 // pred_fallthru
      _
    // Predicated region
    $region14: #{simple_nn_forward.1} parent=1 // pred_check
      _
    $region15: #{simple_nn_forward.1} parent=1 // pred_check_branch
      %30 = sbr.rel (0) target = $region17
    $region16: #{simple_nn_forward.1} parent=1 // pred_region
      %32 = vsyncadd [#allocation5], 0
      %s33 = sshll.u32 %s3, 4
      %s34 = int_to_ptr.hbm [resolvable:$true] %s33
      %s35 = sshll.u32 [#allocation4], 4
      %s36 = int_to_ptr.vmem [resolvable:$true] %s35
      %41 = dma.hbm_to_vmem [thread:$0]  %s34, 1024, %s36, [#allocation5], 64, 64, 4
    $region17: #{simple_nn_forward.1} parent=1 // pred_fallthru
      _
    // Predicated region
    $region18: #{simple_nn_forward.1} parent=1 // pred_check
      _
    $region19: #{simple_nn_forward.1} parent=1 // pred_check_branch
      %43 = sbr.rel (0) target = $region21
    $region20: #{simple_nn_forward.1} parent=1 // pred_region
      _
    $region21: #{simple_nn_forward.1} parent=1 // pred_fallthru
      _
    // Predicated region
    $region22: #{simple_nn_forward.1} parent=1 // pred_check
      _
    $region23: #{simple_nn_forward.1} parent=1 // pred_check_branch
      %45 = sbr.rel (0) target = $region25
    $region24: #{simple_nn_forward.1} parent=1 // pred_region
      %47 = dma.done [#allocation3], 1024
    $region25: #{simple_nn_forward.1} parent=1 // pred_fallthru
      _
    // Predicated region
    $region26: #{simple_nn_forward.1} parent=1 // pred_check
      _
    $region27: #{simple_nn_forward.1} parent=1 // pred_check_branch
      %49 = sbr.rel (0) target = $region29
    $region28: #{simple_nn_forward.1} parent=1 // pred_region
      %51 = dma.done [#allocation5], 1024
    $region29: #{simple_nn_forward.1} parent=1 // pred_fallthru
      _
    %v52 = vld [vmem:[%s0] sm:$0xf]
    %v53 = vld [vmem:[%s0 + $0x4] sm:$0xf]
    %v54 = vld [vmem:[#allocation2] sm:$0xf]
    %v55 = vld [vmem:[#allocation2 + $0x4] sm:$0xf]
    %v56 = vld [vmem:[#allocation2 + $0x8] sm:$0xf]
    %v57 = vld [vmem:[#allocation2 + $0xc] sm:$0xf]
    %v58 = vld [vmem:[#allocation2 + $0x10] sm:$0xf]
    %v59 = vld [vmem:[#allocation2 + $0x14] sm:$0xf]
    %v60 = vld [vmem:[#allocation2 + $0x18] sm:$0xf]
    %v61 = vld [vmem:[#allocation2 + $0x1c] sm:$0xf]
    %v62 = vld [vmem:[#allocation2 + $0x20] sm:$0xf]
    %v63 = vld [vmem:[#allocation2 + $0x24] sm:$0xf]
    %v64 = vld [vmem:[#allocation2 + $0x28] sm:$0xf]
    %v65 = vld [vmem:[#allocation2 + $0x2c] sm:$0xf]
    %v66 = vld [vmem:[#allocation2 + $0x30] sm:$0xf]
    %v67 = vld [vmem:[#allocation2 + $0x34] sm:$0xf]
    %v68 = vld [vmem:[#allocation2 + $0x38] sm:$0xf]
    %v69 = vld [vmem:[#allocation2 + $0x3c] sm:$0xf]
    %v70 = vld [vmem:[%s2] sm:$0x1]
    %v72 = vperm.slane %v70, 0
    %v76 = vunpack.c.l.b16 %v52
    %v77 = vunpack.c.l.b16 %v53
    %v78 = vpack.c.b16 %v77, %v76
    %v96 = vunpack.c.l.b16 %v54
    %v97 = vunpack.c.l.b16 %v55
    %v98 = vunpack.c.l.b16 %v56
    %v99 = vunpack.c.l.b16 %v57
    %v100 = vunpack.c.l.b16 %v58
    %v101 = vunpack.c.l.b16 %v59
    %v102 = vunpack.c.l.b16 %v60
    %v103 = vunpack.c.l.b16 %v61
    %v104 = vunpack.c.l.b16 %v62
    %v105 = vunpack.c.l.b16 %v63
    %v106 = vunpack.c.l.b16 %v64
    %v107 = vunpack.c.l.b16 %v65
    %v108 = vunpack.c.l.b16 %v66
    %v109 = vunpack.c.l.b16 %v67
    %v110 = vunpack.c.l.b16 %v68
    %v111 = vunpack.c.l.b16 %v69
    %v112 = vpack.c.b16 %v97, %v96
    %v113 = vpack.c.b16 %v99, %v98
    %v114 = vpack.c.b16 %v101, %v100
    %v115 = vpack.c.b16 %v103, %v102
    %v116 = vpack.c.b16 %v105, %v104
    %v117 = vpack.c.b16 %v107, %v106
    %v118 = vpack.c.b16 %v109, %v108
    %v119 = vpack.c.b16 %v111, %v110
    %128 = vmatpush.bf16.msra.mxu0 %v119
    %129 = vmatpush.bf16.msra.mxu0 %v118
    %130 = vmatpush.bf16.msra.mxu0 %v117
    %131 = vmatpush.bf16.msra.mxu0 %v116
    %132 = vmatpush.bf16.msra.mxu0 %v115
    %133 = vmatpush.bf16.msra.mxu0 %v114
    %134 = vmatpush.bf16.msra.mxu0 %v113
    %135 = vmatpush.bf16.msra.mxu0 %v112
    %136 = vmatmul.bf16.gmra.mxu0 %v78
    %v137 = vpop.f32.mrf.mxu0
    %v138 = vadd.f32 %v72, %v137
    %v139 = vpop.f32.mrf.mxu0
    %v140 = vadd.f32 %v72, %v139
    %141 = vdwg.mxu0
    %v142 = vmax.f32 %v138, 0.0
    %v143 = vmax.f32 %v140, 0.0
    %v144 = vpack.c.bf16 %v143, %v142
    %v145 = vld [vmem:[#allocation4] sm:$0xf]
    %v146 = vld [vmem:[#allocation4 + $0x4] sm:$0xf]
    %v147 = vld [vmem:[#allocation4 + $0x8] sm:$0xf]
    %v148 = vld [vmem:[#allocation4 + $0xc] sm:$0xf]
    %v149 = vld [vmem:[#allocation4 + $0x10] sm:$0xf]
    %v150 = vld [vmem:[#allocation4 + $0x14] sm:$0xf]
    %v151 = vld [vmem:[#allocation4 + $0x18] sm:$0xf]
    %v152 = vld [vmem:[#allocation4 + $0x1c] sm:$0xf]
    %v153 = vld [vmem:[#allocation4 + $0x20] sm:$0xf]
    %v154 = vld [vmem:[#allocation4 + $0x24] sm:$0xf]
    %v155 = vld [vmem:[#allocation4 + $0x28] sm:$0xf]
    %v156 = vld [vmem:[#allocation4 + $0x2c] sm:$0xf]
    %v157 = vld [vmem:[#allocation4 + $0x30] sm:$0xf]
    %v158 = vld [vmem:[#allocation4 + $0x34] sm:$0xf]
    %v159 = vld [vmem:[#allocation4 + $0x38] sm:$0xf]
    %v160 = vld [vmem:[#allocation4 + $0x3c] sm:$0xf]
    %v161 = vld [vmem:[%s4] sm:$0x1]
    %v163 = vperm.slane %v161, 0
    %v181 = vunpack.c.l.b16 %v145
    %v182 = vunpack.c.l.b16 %v146
    %v183 = vunpack.c.l.b16 %v147
    %v184 = vunpack.c.l.b16 %v148
    %v185 = vunpack.c.l.b16 %v149
    %v186 = vunpack.c.l.b16 %v150
    %v187 = vunpack.c.l.b16 %v151
    %v188 = vunpack.c.l.b16 %v152
    %v189 = vunpack.c.l.b16 %v153
    %v190 = vunpack.c.l.b16 %v154
    %v191 = vunpack.c.l.b16 %v155
    %v192 = vunpack.c.l.b16 %v156
    %v193 = vunpack.c.l.b16 %v157
    %v194 = vunpack.c.l.b16 %v158
    %v195 = vunpack.c.l.b16 %v159
    %v196 = vunpack.c.l.b16 %v160
    %v197 = vpack.c.b16 %v182, %v181
    %v198 = vpack.c.b16 %v184, %v183
    %v199 = vpack.c.b16 %v186, %v185
    %v200 = vpack.c.b16 %v188, %v187
    %v201 = vpack.c.b16 %v190, %v189
    %v202 = vpack.c.b16 %v192, %v191
    %v203 = vpack.c.b16 %v194, %v193
    %v204 = vpack.c.b16 %v196, %v195
    %213 = vmatpush.bf16.msra.mxu0 %v204
    %214 = vmatpush.bf16.msra.mxu0 %v203
    %215 = vmatpush.bf16.msra.mxu0 %v202
    %216 = vmatpush.bf16.msra.mxu0 %v201
    %217 = vmatpush.bf16.msra.mxu0 %v200
    %218 = vmatpush.bf16.msra.mxu0 %v199
    %219 = vmatpush.bf16.msra.mxu0 %v198
    %220 = vmatpush.bf16.msra.mxu0 %v197
    %221 = vmatmul.bf16.gmra.mxu0 %v144
    %v222 = vpop.f32.mrf.mxu0
    %v223 = vadd.f32 %v163, %v222
    %v224 = vpop.f32.mrf.mxu0
    %v225 = vadd.f32 %v163, %v224
    %226 = vdwg.mxu0
    %v227 = vpack.c.bf16 %v223, %v223
    %v228 = vpack.c.bf16 %v225, %v225
    %229 = vst [vmem:[%s5] sm:$0xf] %v227
    %230 = vst [vmem:[%s5 + $0x4] sm:$0xf] %v228
    // Predicated region
    $region30: #{simple_nn_forward.1} parent=1 // pred_check
      _
    $region31: #{simple_nn_forward.1} parent=1 // pred_check_branch
      %232 = sbr.rel (0) target = $region33
    $region32: #{simple_nn_forward.1} parent=1 // pred_region
      _
    $region33: #{simple_nn_forward.1} parent=1 // pred_fallthru
      _
    // Predicated region
    $region34: #{simple_nn_forward.1} parent=1 // pred_check
      _
    $region35: #{simple_nn_forward.1} parent=1 // pred_check_branch
      %234 = sbr.rel (0) target = $region37
    $region36: #{simple_nn_forward.1} parent=1 // pred_region
      _
    $region37: #{simple_nn_forward.1} parent=1 // pred_fallthru
      _
    %235 = vsyncpa [#allocation3], 1
    %236 = vsyncpa [#allocation5], 1

</llo_original>
